<compile_context>
chip_gen: v7x
topology: tpu7x:2x2x1
jax: 0.10.0
libtpu: 0.0.40
codegen_flags: <defaults>
</compile_context>

<pallas_src>
import functools

import jax
import jax.numpy as jnp
from jax.experimental import pallas as pl
from jax.experimental.pallas import tpu as pltpu


def _critic_kernel(sa_ref, w1_ref, b1_ref, w2_ref, b2_ref, w3_ref, b3_ref,
                   q_ref):
    # ---- Layer 1: fused twin-head projection (bf16 MXU, f32 accumulate) ----
    h1 = jnp.dot(sa_ref[...], w1_ref[...], preferred_element_type=jnp.float32)
    h1 = jnp.maximum(h1 + b1_ref[...], 0.0)                    # (TB, 2*H1) f32

    H1 = h1.shape[-1] // 2
    h1a = h1[:, :H1].astype(jnp.bfloat16)
    h1b = h1[:, H1:].astype(jnp.bfloat16)

    # ---- Layer 2: per-head stacked weights (bf16 MXU, f32 accumulate) ------
    b2 = b2_ref[...]                                            # (1, 2*H2) f32
    H2 = b2.shape[-1] // 2
    h2a = jnp.maximum(
        jnp.dot(h1a, w2_ref[0], preferred_element_type=jnp.float32)
        + b2[:, :H2], 0.0)                                      # (TB, H2) f32
    h2b = jnp.maximum(
        jnp.dot(h1b, w2_ref[1], preferred_element_type=jnp.float32)
        + b2[:, H2:], 0.0)                                      # (TB, H2) f32

    # ---- Layer 3: off the MXU -> VPU multiply + lane reduction (XLU) -------
    w3 = w3_ref[...]                                            # (2, H2) f32
    q1 = jnp.sum(h2a * w3[0:1, :], axis=-1, keepdims=True)      # (TB, 1)
    q2 = jnp.sum(h2b * w3[1:2, :], axis=-1, keepdims=True)      # (TB, 1)
    q_ref[...] = jnp.concatenate([q1, q2], axis=-1) + b3_ref[...]


def pack_critic_params(params):
    """Packs the two heads into 6 kernel arrays. Call ONCE (when params change),
    not per forward; the packed dict is the canonical kernel parameter layout."""
    p1, p2 = params["q1"], params["q2"]
    w1 = jnp.concatenate([p1["w1"], p2["w1"]], axis=1).astype(jnp.bfloat16)  # (in, 2*H1)
    b1 = jnp.concatenate([p1["b1"], p2["b1"]], axis=1).astype(jnp.float32)   # (1, 2*H1)
    w2 = jnp.stack([p1["w2"], p2["w2"]], axis=0).astype(jnp.bfloat16)        # (2, H1, H2)
    b2 = jnp.concatenate([p1["b2"], p2["b2"]], axis=1).astype(jnp.float32)   # (1, 2*H2)
    w3 = jnp.concatenate([p1["w3"].T, p2["w3"].T], axis=0).astype(jnp.float32)  # (2, H2)
    b3 = jnp.concatenate([p1["b3"], p2["b3"]], axis=1).astype(jnp.float32)   # (1, 2)
    return dict(w1=w1, b1=b1, w2=w2, b2=b2, w3=w3, b3=b3)


def critic_forward(state, action, packed, *, block_b=1024):
    """Runs both Q heads in one Pallas kernel. Returns (q1, q2), each [B, 1]."""
    B = state.shape[0]
    # One cheap concat + bf16 cast in the wrapper (saves MXU pushes + halves
    # input DMA); much cheaper than split tiny-K matmuls inside the kernel.
    sa = jnp.concatenate([state, action], axis=1).astype(jnp.bfloat16)
    in_dim = sa.shape[1]

    w1, b1, w2, b2, w3, b3 = (packed[k] for k in ("w1", "b1", "w2", "b2", "w3", "b3"))
    H1 = w1.shape[1] // 2
    H2 = w2.shape[2]

    # Tile selection: full batch for tiny B; otherwise >= 2 grid steps so the
    # "parallel" batch axis shards across v7x's two TensorCores, capped at
    # block_b rows per step.
    if B <= 16:
        TB = B
    else:
        TB = min(block_b, ((pl.cdiv(B, 2) + 7) // 8) * 8)
        TB = max(8, TB)
        if TB >= B:
            TB = B
    grid = (pl.cdiv(B, TB),)

    const2 = lambda i: (0, 0)
    const3 = lambda i: (0, 0, 0)

    in_specs = [
        pl.BlockSpec((TB, in_dim), lambda i: (i, 0)),   # streamed activations
        pl.BlockSpec(w1.shape, const2),                 # resident weights
        pl.BlockSpec(b1.shape, const2),
        pl.BlockSpec(w2.shape, const3),
        pl.BlockSpec(b2.shape, const2),
        pl.BlockSpec(w3.shape, const2),
        pl.BlockSpec(b3.shape, const2),
    ]
    out_specs = pl.BlockSpec((TB, 2), lambda i: (i, 0))

    # Cost hint for XLA's scheduler.
    flops = 2 * B * (in_dim * 2 * H1 + 2 * H1 * H2) + 4 * B * H2
    param_bytes = int(sum(int(v.size) * jnp.dtype(v.dtype).itemsize
                          for v in packed.values()))
    bytes_accessed = int(B * in_dim * 2 + B * 2 * 4 + param_bytes)

    # Per-step VMEM footprint estimate (with 2x margin), clamped to a limit
    # that is safe on every generation (<= 48 MiB < v7x's 64 MiB physical).
    act_bytes = (2 * TB * in_dim * 2        # sa blocks (bf16, double-buffered)
                 + 2 * TB * 128 * 4         # output blocks padded to 128 lanes
                 + TB * 2 * H1 * (4 + 2)    # h1 f32 + bf16 copies
                 + 2 * TB * H2 * 4          # h2a / h2b
                 + TB * 2 * 4)              # q
    vmem_limit = int(min(max(2 * (param_bytes + act_bytes), 32 * 1024 * 1024),
                         48 * 1024 * 1024))

    q12 = pl.pallas_call(
        _critic_kernel,
        out_shape=jax.ShapeDtypeStruct((B, 2), jnp.float32),
        grid=grid,
        in_specs=in_specs,
        out_specs=out_specs,
        compiler_params=pltpu.CompilerParams(
            dimension_semantics=("parallel",),
            vmem_limit_bytes=vmem_limit),
        cost_estimate=pl.CostEstimate(
            flops=flops, transcendentals=0, bytes_accessed=bytes_accessed),
    )(sa, w1, b1, w2, b2, w3, b3)

    return q12[:, 0:1], q12[:, 1:2]


def init_critic_params(key, state_dim, action_dim, hidden_dims=(256, 256)):
    """Deterministic init mimicking PyTorch nn.Linear default (U[-1/sqrt(fan_in), ...])."""
    in_dim = state_dim + action_dim
    dims = [in_dim, hidden_dims[0], hidden_dims[1], 1]

    def linear(k, fan_in, fan_out):
        kw, kb = jax.random.split(k)
        bound = 1.0 / jnp.sqrt(fan_in)
        w = jax.random.uniform(kw, (fan_in, fan_out), jnp.float32, -bound, bound)
        b = jax.random.uniform(kb, (1, fan_out), jnp.float32, -bound, bound)
        return w, b

    params = {}
    keys = jax.random.split(key, 6)
    for hi, head in enumerate(("q1", "q2")):
        w1, b1 = linear(keys[hi * 3 + 0], dims[0], dims[1])
        w2, b2 = linear(keys[hi * 3 + 1], dims[1], dims[2])
        w3, b3 = linear(keys[hi * 3 + 2], dims[2], dims[3])
        params[head] = dict(w1=w1, b1=b1, w2=w2, b2=b2, w3=w3, b3=b3)
    return params


def _reference_forward_f32(state, action, params):
    """Pure-JAX f32 reference (the original module's semantics)."""
    sa = jnp.concatenate([state, action], axis=1)

    def mlp(p):
        h = jnp.maximum(sa @ p["w1"] + p["b1"], 0.0)
        h = jnp.maximum(h @ p["w2"] + p["b2"], 0.0)
        return h @ p["w3"] + p["b3"]

    return mlp(params["q1"]), mlp(params["q2"])


def _reference_forward_mixed(state, action, params):
    """Pure-JAX reference with the same bf16-operand / f32-accumulate scheme
    as the kernel (tight correctness check of the kernel math/packing)."""
    sa = jnp.concatenate([state, action], axis=1).astype(jnp.bfloat16)

    def mlp(p):
        h = jnp.dot(sa, p["w1"].astype(jnp.bfloat16),
                    preferred_element_type=jnp.float32) + p["b1"]
        h = jnp.maximum(h, 0.0).astype(jnp.bfloat16)
        h = jnp.dot(h, p["w2"].astype(jnp.bfloat16),
                    preferred_element_type=jnp.float32) + p["b2"]
        h = jnp.maximum(h, 0.0)
        return jnp.sum(h * p["w3"].T, axis=-1, keepdims=True) + p["b3"]

    return mlp(params["q1"]), mlp(params["q2"])


if __name__ == "__main__":
    # Small shapes consistent with the module's forward.
    batch = 4
    state_dim = 8
    action_dim = 4
    hidden_dims = (32, 32)

    key = jax.random.PRNGKey(0)
    k_params, k_state, k_action = jax.random.split(key, 3)

    params = init_critic_params(k_params, state_dim, action_dim, hidden_dims)
    packed = pack_critic_params(params)   # packed ONCE, outside the fwd path
    state = jax.random.normal(k_state, (batch, state_dim), jnp.float32)
    action = jax.random.normal(k_action, (batch, action_dim), jnp.float32)

    fwd = jax.jit(functools.partial(critic_forward))
    q1, q2 = fwd(state, action, packed)
    jax.block_until_ready((q1, q2))

    m1, m2 = _reference_forward_mixed(state, action, params)
    r1, r2 = _reference_forward_f32(state, action, params)
    assert q1.shape == (batch, 1) and q2.shape == (batch, 1)
    # Tight check vs. matching mixed-precision reference (kernel math/packing).
    assert jnp.allclose(q1, m1, atol=2e-3, rtol=2e-3)
    assert jnp.allclose(q2, m2, atol=2e-3, rtol=2e-3)
    # Looser sanity check vs. the original f32 module semantics (bf16 operands).
    assert jnp.allclose(q1, r1, atol=5e-2, rtol=5e-2)
    assert jnp.allclose(q2, r2, atol=5e-2, rtol=5e-2)

    # Second check: exercises the batch grid (multiple steps + padded last tile).
    batch2 = 20
    k_s2, k_a2 = jax.random.split(jax.random.PRNGKey(1))
    state2 = jax.random.normal(k_s2, (batch2, state_dim), jnp.float32)
    action2 = jax.random.normal(k_a2, (batch2, action_dim), jnp.float32)
    fwd_tiled = jax.jit(functools.partial(critic_forward, block_b=8))
    q1b, q2b = fwd_tiled(state2, action2, packed)
    jax.block_until_ready((q1b, q2b))
    m1b, m2b = _reference_forward_mixed(state2, action2, params)
    r1b, r2b = _reference_forward_f32(state2, action2, params)
    assert jnp.allclose(q1b, m1b, atol=2e-3, rtol=2e-3)
    assert jnp.allclose(q2b, m2b, atol=2e-3, rtol=2e-3)
    assert jnp.allclose(q1b, r1b, atol=5e-2, rtol=5e-2)
    assert jnp.allclose(q2b, r2b, atol=5e-2, rtol=5e-2)

    print("KERNEL_OK")
</pallas_src>

<mosaic_0001>
module attributes {stable_mosaic.version = 11 : i64} {
  func.func @_critic_kernel(%arg0: i32, %arg1: memref<4x12xbf16, #tpu.memory_space<vmem>>, %arg2: memref<12x64xbf16, #tpu.memory_space<vmem>>, %arg3: memref<1x64xf32, #tpu.memory_space<vmem>>, %arg4: memref<2x32x32xbf16, #tpu.memory_space<vmem>>, %arg5: memref<1x64xf32, #tpu.memory_space<vmem>>, %arg6: memref<2x32xf32, #tpu.memory_space<vmem>>, %arg7: memref<1x2xf32, #tpu.memory_space<vmem>>, %arg8: memref<4x2xf32, #tpu.memory_space<vmem>>) attributes {dimension_semantics = [#tpu.dimension_semantics<parallel>], iteration_bounds = array<i64: 1>, scalar_prefetch = 0 : i64, scratch_operands = 0 : i64, tpu.core_type = #tpu.core_type<tc>, window_params = [{transform_indices = @transform_0, window_bounds = array<i64: 4, 12>}, {pipeline_mode = #tpu.pipeline_mode<synchronous>, transform_indices = @transform_1, window_bounds = array<i64: 12, 64>}, {pipeline_mode = #tpu.pipeline_mode<synchronous>, transform_indices = @transform_2, window_bounds = array<i64: 1, 64>}, {pipeline_mode = #tpu.pipeline_mode<synchronous>, transform_indices = @transform_3, window_bounds = array<i64: 2, 32, 32>}, {pipeline_mode = #tpu.pipeline_mode<synchronous>, transform_indices = @transform_4, window_bounds = array<i64: 1, 64>}, {pipeline_mode = #tpu.pipeline_mode<synchronous>, transform_indices = @transform_5, window_bounds = array<i64: 2, 32>}, {pipeline_mode = #tpu.pipeline_mode<synchronous>, transform_indices = @transform_6, window_bounds = array<i64: 1, 2>}, {transform_indices = @transform_7, window_bounds = array<i64: 4, 2>}]} {
    %c0 = arith.constant 0 : index
    %c0_0 = arith.constant 0 : index
    %0 = vector.load %arg1[%c0, %c0_0] : memref<4x12xbf16, #tpu.memory_space<vmem>>, vector<4x12xbf16>
    %c0_1 = arith.constant 0 : index
    %c0_2 = arith.constant 0 : index
    %1 = vector.load %arg2[%c0_1, %c0_2] : memref<12x64xbf16, #tpu.memory_space<vmem>>, vector<12x64xbf16>
    %cst = arith.constant dense<0.000000e+00> : vector<4x64xf32>
    %2 = tpu.matmul %0, %1, %cst {dimension_numbers = #tpu.dot_dimension_numbers<[1], [0], [0], [1], [0, 0, 1, 1], [], []>} : vector<4x12xbf16>, vector<12x64xbf16>, vector<4x64xf32> -> vector<4x64xf32>
    %c0_3 = arith.constant 0 : index
    %c0_4 = arith.constant 0 : index
    %3 = vector.load %arg3[%c0_3, %c0_4] : memref<1x64xf32, #tpu.memory_space<vmem>>, vector<1x64xf32>
    %4 = vector.broadcast %3 : vector<1x64xf32> to vector<4x64xf32>
    %5 = arith.addf %2, %4 : vector<4x64xf32>
    %cst_5 = arith.constant 0.000000e+00 : f32
    %6 = vector.broadcast %cst_5 : f32 to vector<4x64xf32>
    %7 = arith.maximumf %5, %6 : vector<4x64xf32>
    %8 = vector.extract_strided_slice %7 {offsets = [0, 0], sizes = [4, 32], strides = [1, 1]} : vector<4x64xf32> to vector<4x32xf32>
    %9 = arith.truncf %8 : vector<4x32xf32> to vector<4x32xbf16>
    %10 = vector.extract_strided_slice %7 {offsets = [0, 32], sizes = [4, 32], strides = [1, 1]} : vector<4x64xf32> to vector<4x32xf32>
    %11 = arith.truncf %10 : vector<4x32xf32> to vector<4x32xbf16>
    %c0_6 = arith.constant 0 : index
    %c0_7 = arith.constant 0 : index
    %12 = vector.load %arg5[%c0_6, %c0_7] : memref<1x64xf32, #tpu.memory_space<vmem>>, vector<1x64xf32>
    %c0_8 = arith.constant 0 : index
    %c0_9 = arith.constant 0 : index
    %c0_10 = arith.constant 0 : index
    %13 = vector.load %arg4[%c0_8, %c0_9, %c0_10] : memref<2x32x32xbf16, #tpu.memory_space<vmem>>, vector<1x32x32xbf16>
    %14 = vector.shape_cast %13 : vector<1x32x32xbf16> to vector<32x32xbf16>
    %cst_11 = arith.constant dense<0.000000e+00> : vector<4x32xf32>
    %15 = tpu.matmul %9, %14, %cst_11 {dimension_numbers = #tpu.dot_dimension_numbers<[1], [0], [0], [1], [0, 0, 1, 1], [], []>} : vector<4x32xbf16>, vector<32x32xbf16>, vector<4x32xf32> -> vector<4x32xf32>
    %16 = vector.extract_strided_slice %12 {offsets = [0, 0], sizes = [1, 32], strides = [1, 1]} : vector<1x64xf32> to vector<1x32xf32>
    %17 = vector.broadcast %16 : vector<1x32xf32> to vector<4x32xf32>
    %18 = arith.addf %15, %17 : vector<4x32xf32>
    %cst_12 = arith.constant 0.000000e+00 : f32
    %19 = vector.broadcast %cst_12 : f32 to vector<4x32xf32>
    %20 = arith.maximumf %18, %19 : vector<4x32xf32>
    %c1 = arith.constant 1 : index
    %c0_13 = arith.constant 0 : index
    %c0_14 = arith.constant 0 : index
    %21 = vector.load %arg4[%c1, %c0_13, %c0_14] : memref<2x32x32xbf16, #tpu.memory_space<vmem>>, vector<1x32x32xbf16>
    %22 = vector.shape_cast %21 : vector<1x32x32xbf16> to vector<32x32xbf16>
    %cst_15 = arith.constant dense<0.000000e+00> : vector<4x32xf32>
    %23 = tpu.matmul %11, %22, %cst_15 {dimension_numbers = #tpu.dot_dimension_numbers<[1], [0], [0], [1], [0, 0, 1, 1], [], []>} : vector<4x32xbf16>, vector<32x32xbf16>, vector<4x32xf32> -> vector<4x32xf32>
    %24 = vector.extract_strided_slice %12 {offsets = [0, 32], sizes = [1, 32], strides = [1, 1]} : vector<1x64xf32> to vector<1x32xf32>
    %25 = vector.broadcast %24 : vector<1x32xf32> to vector<4x32xf32>
    %26 = arith.addf %23, %25 : vector<4x32xf32>
    %cst_16 = arith.constant 0.000000e+00 : f32
    %27 = vector.broadcast %cst_16 : f32 to vector<4x32xf32>
    %28 = arith.maximumf %26, %27 : vector<4x32xf32>
    %c0_17 = arith.constant 0 : index
    %c0_18 = arith.constant 0 : index
    %29 = vector.load %arg6[%c0_17, %c0_18] : memref<2x32xf32, #tpu.memory_space<vmem>>, vector<2x32xf32>
    %30 = vector.extract_strided_slice %29 {offsets = [0, 0], sizes = [1, 32], strides = [1, 1]} : vector<2x32xf32> to vector<1x32xf32>
    %31 = vector.broadcast %30 : vector<1x32xf32> to vector<4x32xf32>
    %32 = arith.mulf %20, %31 : vector<4x32xf32>
    %cst_19 = arith.constant dense<0.000000e+00> : vector<4xf32>
    %33 = vector.multi_reduction <add>, %32, %cst_19 [1] : vector<4x32xf32> to vector<4xf32>
    %34 = vector.shape_cast %33 : vector<4xf32> to vector<4x1xf32>
    %35 = vector.extract_strided_slice %29 {offsets = [1, 0], sizes = [1, 32], strides = [1, 1]} : vector<2x32xf32> to vector<1x32xf32>
    %36 = vector.broadcast %35 : vector<1x32xf32> to vector<4x32xf32>
    %37 = arith.mulf %28, %36 : vector<4x32xf32>
    %cst_20 = arith.constant dense<0.000000e+00> : vector<4xf32>
    %38 = vector.multi_reduction <add>, %37, %cst_20 [1] : vector<4x32xf32> to vector<4xf32>
    %39 = vector.shape_cast %38 : vector<4xf32> to vector<4x1xf32>
    %40 = tpu.concatenate %34, %39 in 1 : vector<4x1xf32>, vector<4x1xf32> -> vector<4x2xf32>
    %c0_21 = arith.constant 0 : index
    %c0_22 = arith.constant 0 : index
    %41 = vector.load %arg7[%c0_21, %c0_22] : memref<1x2xf32, #tpu.memory_space<vmem>>, vector<1x2xf32>
    %42 = vector.broadcast %41 : vector<1x2xf32> to vector<4x2xf32>
    %43 = arith.addf %40, %42 : vector<4x2xf32>
    %c0_23 = arith.constant 0 : index
    %c0_24 = arith.constant 0 : index
    %44 = vector.load %arg8[%c0_23, %c0_24] : memref<4x2xf32, #tpu.memory_space<vmem>>, vector<4x2xf32>
    tpu.vector_store %arg8[%c0_23, %c0_24], %43 {strides = array<i32>} : memref<4x2xf32, #tpu.memory_space<vmem>>, vector<4x2xf32>,
    return
  }
  func.func @transform_0(%arg0: i32) -> (i32, i32) {
    %c0_i32 = arith.constant 0 : i32
    %c0_i32_0 = arith.constant 0 : i32
    return %arg0, %c0_i32 : i32, i32
  }
  func.func @transform_1(%arg0: i32) -> (i32, i32) {
    %c0_i32 = arith.constant 0 : i32
    %c0_i32_0 = arith.constant 0 : i32
    %c0_i32_1 = arith.constant 0 : i32
    return %c0_i32, %c0_i32_0 : i32, i32
  }
  func.func @transform_2(%arg0: i32) -> (i32, i32) {
    %c0_i32 = arith.constant 0 : i32
    %c0_i32_0 = arith.constant 0 : i32
    %c0_i32_1 = arith.constant 0 : i32
    return %c0_i32, %c0_i32_0 : i32, i32
  }
  func.func @transform_3(%arg0: i32) -> (i32, i32, i32) {
    %c0_i32 = arith.constant 0 : i32
    %c0_i32_0 = arith.constant 0 : i32
    %c0_i32_1 = arith.constant 0 : i32
    %c0_i32_2 = arith.constant 0 : i32
    return %c0_i32, %c0_i32_0, %c0_i32_1 : i32, i32, i32
  }
  func.func @transform_4(%arg0: i32) -> (i32, i32) {
    %c0_i32 = arith.constant 0 : i32
    %c0_i32_0 = arith.constant 0 : i32
    %c0_i32_1 = arith.constant 0 : i32
    return %c0_i32, %c0_i32_0 : i32, i32
  }
  func.func @transform_5(%arg0: i32) -> (i32, i32) {
    %c0_i32 = arith.constant 0 : i32
    %c0_i32_0 = arith.constant 0 : i32
    %c0_i32_1 = arith.constant 0 : i32
    return %c0_i32, %c0_i32_0 : i32, i32
  }
  func.func @transform_6(%arg0: i32) -> (i32, i32) {
    %c0_i32 = arith.constant 0 : i32
    %c0_i32_0 = arith.constant 0 : i32
    %c0_i32_1 = arith.constant 0 : i32
    return %c0_i32, %c0_i32_0 : i32, i32
  }
  func.func @transform_7(%arg0: i32) -> (i32, i32) {
    %c0_i32 = arith.constant 0 : i32
    %c0_i32_0 = arith.constant 0 : i32
    return %arg0, %c0_i32 : i32, i32
  }
}

</mosaic_0001>

<llo_original>
// kernel: critic_forward.1
$region0: #{critic_forward.1}
  #allocation0 [shape = 'u32[]', space=smem, size = 0x4, offset = 0x4, fixed_abs, tag = 'smem constant byte address 0x4 - core index']
  #allocation1 [shape = 'u32[144,128]{1,0:T(1,128)}', space=vmem, size = 0x12000, scoped, tag = 'internal scratch']
  %s0 = inlined_call_operand.vmem [shape: bf16[4,12], index: 0, kind: input, shape index: {}]
  %s1 = inlined_call_operand.vmem [shape: bf16[12,64], index: 1, kind: input, shape index: {}]
  %s2 = inlined_call_operand.hbm [shape: f32[1,64], index: 2, kind: input, shape index: {}]
  %s3 = inlined_call_operand.vmem [shape: bf16[2,32,32], index: 3, kind: input, shape index: {}]
  %s4 = inlined_call_operand.hbm [shape: f32[1,64], index: 4, kind: input, shape index: {}]
  %s5 = inlined_call_operand.vmem [shape: f32[2,32], index: 5, kind: input, shape index: {}]
  %s6 = inlined_call_operand.hbm [shape: f32[1,2], index: 6, kind: input, shape index: {}]
  %s7 = inlined_call_operand.vmem [shape: f32[4,2], index: 7, kind: output, shape index: {}]
  %s8 = sld [smem:[#allocation0]]
  $region50: #{critic_forward.1} parent=0
    _
  %s10 = ssub.s32 1, %s8
  %s11 = scalar_select 0, %s10, %s8
  $region1: #{critic_forward.1} parent=0
    #allocation2 [shape = 'u8[512]{0}', space=vmem, size = 0x400, scoped, tag = 'input window, operand 2, single buffered']
    #allocation3 [shape = 's32[1]{0}', space=sflag, size = 0x4, scoped, tag = 'scoped memory for critic_forward.1']
    #allocation4 [shape = 'u8[512]{0}', space=vmem, size = 0x400, scoped, tag = 'input window, operand 4, single buffered']
    #allocation5 [shape = 's32[1]{0}', space=sflag, size = 0x4, scoped, tag = 'scoped memory for critic_forward.1']
    #allocation6 [shape = 'u8[512]{0}', space=vmem, size = 0x400, scoped, tag = 'input window, operand 6, single buffered']
    %12 = vsyncpa [#allocation3], 0
    %13 = vsyncpa [#allocation5], 0
    // Predicated region
    $region2: #{critic_forward.1} parent=1 // pred_check
      _
    $region3: #{critic_forward.1} parent=1 // pred_check_branch
      %15 = sbr.rel (0) target = $region5
    $region4: #{critic_forward.1} parent=1 // pred_region
      _
    $region5: #{critic_forward.1} parent=1 // pred_fallthru
      _
    // Predicated region
    $region6: #{critic_forward.1} parent=1 // pred_check
      _
    $region7: #{critic_forward.1} parent=1 // pred_check_branch
      %17 = sbr.rel (0) target = $region9
    $region8: #{critic_forward.1} parent=1 // pred_region
      _
    $region9: #{critic_forward.1} parent=1 // pred_fallthru
      _
    // Predicated region
    $region10: #{critic_forward.1} parent=1 // pred_check
      _
    $region11: #{critic_forward.1} parent=1 // pred_check_branch
      %19 = sbr.rel (0) target = $region13
    $region12: #{critic_forward.1} parent=1 // pred_region
      %s21 = ssub.s32 16, 16
      %22 = vsyncadd [#allocation3], %s21
      %s24 = sshll.u32 [#allocation2], 4
      %s25 = int_to_ptr.vmem [resolvable:$true] %s24
      %27 = dma.hbm_to_vmem [thread:$0]  %s2, 16, %s25, [#allocation3]
    $region13: #{critic_forward.1} parent=1 // pred_fallthru
      _
    // Predicated region
    $region14: #{critic_forward.1} parent=1 // pred_check
      _
    $region15: #{critic_forward.1} parent=1 // pred_check_branch
      %29 = sbr.rel (0) target = $region17
    $region16: #{critic_forward.1} parent=1 // pred_region
      _
    $region17: #{critic_forward.1} parent=1 // pred_fallthru
      _
    // Predicated region
    $region18: #{critic_forward.1} parent=1 // pred_check
      _
    $region19: #{critic_forward.1} parent=1 // pred_check_branch
      %31 = sbr.rel (0) target = $region21
    $region20: #{critic_forward.1} parent=1 // pred_region
      %s33 = ssub.s32 16, 16
      %34 = vsyncadd [#allocation5], %s33
      %s36 = sshll.u32 [#allocation4], 4
      %s37 = int_to_ptr.vmem [resolvable:$true] %s36
      %39 = dma.hbm_to_vmem [thread:$0]  %s4, 16, %s37, [#allocation5]
    $region21: #{critic_forward.1} parent=1 // pred_fallthru
      _
    // Predicated region
    $region22: #{critic_forward.1} parent=1 // pred_check
      _
    $region23: #{critic_forward.1} parent=1 // pred_check_branch
      %41 = sbr.rel (0) target = $region25
    $region24: #{critic_forward.1} parent=1 // pred_region
      _
    $region25: #{critic_forward.1} parent=1 // pred_fallthru
      _
    // Predicated region
    $region26: #{critic_forward.1} parent=1 // pred_check
      _
    $region27: #{critic_forward.1} parent=1 // pred_check_branch
      %43 = sbr.rel (0) target = $region29
    $region28: #{critic_forward.1} parent=1 // pred_region
      %s45 = ssub.s32 16, 16
      %46 = vsyncadd [#allocation5], %s45
      %s48 = sshll.u32 [#allocation6], 4
      %s49 = int_to_ptr.vmem [resolvable:$true] %s48
      %51 = dma.hbm_to_vmem [thread:$0]  %s6, 16, %s49, [#allocation5]
    $region29: #{critic_forward.1} parent=1 // pred_fallthru
      _
    // Predicated region
    $region30: #{critic_forward.1} parent=1 // pred_check
      _
    $region31: #{critic_forward.1} parent=1 // pred_check_branch
      %53 = sbr.rel (0) target = $region33
    $region32: #{critic_forward.1} parent=1 // pred_region
      %54 = dma.done [#allocation3], 16
    $region33: #{critic_forward.1} parent=1 // pred_fallthru
      _
    // Predicated region
    $region34: #{critic_forward.1} parent=1 // pred_check
      _
    $region35: #{critic_forward.1} parent=1 // pred_check_branch
      %56 = sbr.rel (0) target = $region37
    $region36: #{critic_forward.1} parent=1 // pred_region
      %57 = dma.done [#allocation5], 16
    $region37: #{critic_forward.1} parent=1 // pred_fallthru
      _
    // Predicated region
    $region38: #{critic_forward.1} parent=1 // pred_check
      _
    $region39: #{critic_forward.1} parent=1 // pred_check_branch
      %59 = sbr.rel (0) target = $region41
    $region40: #{critic_forward.1} parent=1 // pred_region
      %60 = dma.done [#allocation5], 16
    $region41: #{critic_forward.1} parent=1 // pred_fallthru
      _
    %v62 = vld [vmem:[%s0] sm:$0x3]
    %v63 = vld [vmem:[%s1] sm:$0xf]
    %v64 = vld [vmem:[%s1 + $0x4] sm:$0x3]
    %v65 = vld [vmem:[#allocation2] sm:$0x1]
    %v67 = vlaneseq
    %v68 = vshrl.u32 %v67, 7
    %v69 = vsub.s32 0, %v68
    %v70 = vrot.slane %v65, %v69
    %v74 = vunpack.c.l.b16 %v63
    %v75 = vunpack.c.l.b16 %v64
    %v76 = vpack.c.b16 %v75, %v74
    %vm77 = vcmask 97280
    %v79 = vsel %vm77, %v62, 0
    %vm81 = vcmask 1045504
    %v83 = vsel %vm81, %v76, 0
    %85 = vmatprep.subr.bf16.mxu0 0
    %86 = vmatpush1.bf16.msra.mxu0 %v83
    %87 = vmatprep.subr.bf16.mxu0 0
    %88 = vmatpush1.bf16.msra.mxu0 0
    %89 = vmatprep.subr.bf16.mxu0 0
    %90 = vmatpush1.bf16.msra.mxu0 0
    %91 = vmatprep.subr.bf16.mxu0 0
    %92 = vmatpush1.bf16.msra.mxu0 0
    %93 = vmatprep.subr.bf16.mxu0 0
    %94 = vmatpush1.bf16.msra.mxu0 0
    %95 = vmatprep.subr.bf16.mxu0 0
    %96 = vmatpush1.bf16.msra.mxu0 0
    %97 = vmatprep.subr.bf16.mxu0 0
    %98 = vmatpush1.bf16.msra.mxu0 0
    %99 = vmatprep.subr.bf16.mxu0 0
    %100 = vmatpush1.bf16.msra.mxu0 0
    %101 = vmatprep.subr.bf16.mxu0 0
    %102 = vmatpush1.bf16.msra.mxu0 0
    %103 = vmatprep.subr.bf16.mxu0 0
    %104 = vmatpush1.bf16.msra.mxu0 0
    %105 = vmatprep.subr.bf16.mxu0 0
    %106 = vmatpush1.bf16.msra.mxu0 0
    %107 = vmatprep.subr.bf16.mxu0 0
    %108 = vmatpush1.bf16.msra.mxu0 0
    %109 = vmatprep.subr.bf16.mxu0 0
    %110 = vmatpush1.bf16.msra.mxu0 0
    %111 = vmatprep.subr.bf16.mxu0 0
    %112 = vmatpush1.bf16.msra.mxu0 0
    %113 = vmatprep.subr.bf16.mxu0 0
    %114 = vmatpush1.bf16.msra.mxu0 0
    %115 = vmatprep.subr.bf16.mxu0 0
    %116 = vmatpush1.bf16.msra.mxu0 0
    %117 = vmatprep.mubr.bf16.mxu0 0
    %118 = vmatmul.mubr.bf16.gmra.mrb[0].mxu0 %v79
    %v119 = vpop.f32.mrb[0].mxu0
    %v120 = vadd.f32 %v70, %v119
    %v121 = vpop.f32.mrb[0].mxu0
    %v122 = vpop.f32.mrb[0].mxu0
    %v123 = vpop.f32.mrb[0].mxu0
    %124 = vdwg.mxu0
    %v125 = vmax.f32 %v120, 0.0
    %v126 = vpack.c.bf16 %v125, %v125
    %v127 = vld [vmem:[#allocation4] sm:$0x1]
    %v128 = vld [vmem:[%s3] sm:$0xf]
    %v129 = vld [vmem:[%s3 + $0x4] sm:$0xf]
    %v130 = vld [vmem:[%s3 + $0x8] sm:$0xf]
    %v131 = vld [vmem:[%s3 + $0xc] sm:$0xf]
    %v133 = vlaneseq
    %v134 = vshrl.u32 %v133, 7
    %v135 = vsub.s32 0, %v134
    %v136 = vrot.slane %v127, %v135
    %v142 = vunpack.c.l.b16 %v128
    %v143 = vunpack.c.l.b16 %v129
    %v144 = vunpack.c.l.b16 %v130
    %v145 = vunpack.c.l.b16 %v131
    %v146 = vpack.c.b16 %v143, %v142
    %v147 = vpack.c.b16 %v145, %v144
    %vm150 = vcmask 261120
    %v152 = vsel %vm150, %v126, 0
    %154 = vmatprep.subr.bf16.mxu0 0
    %155 = vmatpush1.bf16.msra.mxu0 %v146
    %156 = vmatprep.subr.bf16.mxu0 0
    %157 = vmatpush1.bf16.msra.mxu0 %v147
    %158 = vmatprep.subr.bf16.mxu0 0
    %159 = vmatpush1.bf16.msra.mxu0 0
    %160 = vmatprep.subr.bf16.mxu0 0
    %161 = vmatpush1.bf16.msra.mxu0 0
    %162 = vmatprep.subr.bf16.mxu0 0
    %163 = vmatpush1.bf16.msra.mxu0 0
    %164 = vmatprep.subr.bf16.mxu0 0
    %165 = vmatpush1.bf16.msra.mxu0 0
    %166 = vmatprep.subr.bf16.mxu0 0
    %167 = vmatpush1.bf16.msra.mxu0 0
    %168 = vmatprep.subr.bf16.mxu0 0
    %169 = vmatpush1.bf16.msra.mxu0 0
    %170 = vmatprep.subr.bf16.mxu0 0
    %171 = vmatpush1.bf16.msra.mxu0 0
    %172 = vmatprep.subr.bf16.mxu0 0
    %173 = vmatpush1.bf16.msra.mxu0 0
    %174 = vmatprep.subr.bf16.mxu0 0
    %175 = vmatpush1.bf16.msra.mxu0 0
    %176 = vmatprep.subr.bf16.mxu0 0
    %177 = vmatpush1.bf16.msra.mxu0 0
    %178 = vmatprep.subr.bf16.mxu0 0
    %179 = vmatpush1.bf16.msra.mxu0 0
    %180 = vmatprep.subr.bf16.mxu0 0
    %181 = vmatpush1.bf16.msra.mxu0 0
    %182 = vmatprep.subr.bf16.mxu0 0
    %183 = vmatpush1.bf16.msra.mxu0 0
    %184 = vmatprep.subr.bf16.mxu0 0
    %185 = vmatpush1.bf16.msra.mxu0 0
    %186 = vmatprep.mubr.bf16.mxu0 0
    %187 = vmatmul.mubr.bf16.gmra.mrb[0].mxu0 %v152
    %v188 = vpop.f32.mrb[0].mxu0
    %v189 = vadd.f32 %v136, %v188
    %v190 = vpop.f32.mrb[0].mxu0
    %v191 = vpop.f32.mrb[0].mxu0
    %v192 = vpop.f32.mrb[0].mxu0
    %193 = vdwg.mxu0
    %v194 = vmax.f32 %v189, 0.0
    %s195 = scalar_lea.vmem %s3, 16
    %v196 = vld [vmem:[%s195] sm:$0xf]
    %v197 = vld [vmem:[%s195 + $0x4] sm:$0xf]
    %v198 = vld [vmem:[%s195 + $0x8] sm:$0xf]
    %v199 = vld [vmem:[%s195 + $0xc] sm:$0xf]
    %201 = vrot.lane.b32.xlu0 %v126, 96
    %v202 = vpop.permute.xlu0 %201
    %v207 = vunpack.c.l.b16 %v196
    %v208 = vunpack.c.l.b16 %v197
    %v209 = vunpack.c.l.b16 %v198
    %v210 = vunpack.c.l.b16 %v199
    %v211 = vpack.c.b16 %v208, %v207
    %v212 = vpack.c.b16 %v210, %v209
    %215 = vrot.lane.b32.xlu0 %v136, 96
    %v216 = vpop.permute.xlu0 %215
    %v219 = vsel %vm150, %v202, 0
    %221 = vmatprep.subr.bf16.mxu0 0
    %222 = vmatpush1.bf16.msra.mxu0 %v211
    %223 = vmatprep.subr.bf16.mxu0 0
    %224 = vmatpush1.bf16.msra.mxu0 %v212
    %225 = vmatprep.subr.bf16.mxu0 0
    %226 = vmatpush1.bf16.msra.mxu0 0
    %227 = vmatprep.subr.bf16.mxu0 0
    %228 = vmatpush1.bf16.msra.mxu0 0
    %229 = vmatprep.subr.bf16.mxu0 0
    %230 = vmatpush1.bf16.msra.mxu0 0
    %231 = vmatprep.subr.bf16.mxu0 0
    %232 = vmatpush1.bf16.msra.mxu0 0
    %233 = vmatprep.subr.bf16.mxu0 0
    %234 = vmatpush1.bf16.msra.mxu0 0
    %235 = vmatprep.subr.bf16.mxu0 0
    %236 = vmatpush1.bf16.msra.mxu0 0
    %237 = vmatprep.subr.bf16.mxu0 0
    %238 = vmatpush1.bf16.msra.mxu0 0
    %239 = vmatprep.subr.bf16.mxu0 0
    %240 = vmatpush1.bf16.msra.mxu0 0
    %241 = vmatprep.subr.bf16.mxu0 0
    %242 = vmatpush1.bf16.msra.mxu0 0
    %243 = vmatprep.subr.bf16.mxu0 0
    %244 = vmatpush1.bf16.msra.mxu0 0
    %245 = vmatprep.subr.bf16.mxu0 0
    %246 = vmatpush1.bf16.msra.mxu0 0
    %247 = vmatprep.subr.bf16.mxu0 0
    %248 = vmatpush1.bf16.msra.mxu0 0
    %249 = vmatprep.subr.bf16.mxu0 0
    %250 = vmatpush1.bf16.msra.mxu0 0
    %251 = vmatprep.subr.bf16.mxu0 0
    %252 = vmatpush1.bf16.msra.mxu0 0
    %253 = vmatprep.mubr.bf16.mxu0 0
    %254 = vmatmul.mubr.bf16.gmra.mrb[0].mxu0 %v219
    %v255 = vpop.f32.mrb[0].mxu0
    %v256 = vadd.f32 %v216, %v255
    %v257 = vpop.f32.mrb[0].mxu0
    %v258 = vpop.f32.mrb[0].mxu0
    %v259 = vpop.f32.mrb[0].mxu0
    %260 = vdwg.mxu0
    %v261 = vmax.f32 %v256, 0.0
    %v262 = vld [vmem:[%s5] sm:$0x3]
    %v263 = vlaneseq
    %v264 = vshrl.u32 %v263, 7
    %v265 = vsub.s32 0, %v264
    %v266 = vrot.slane %v262, %v265
    %v267 = vmul.f32 %v194, %v266
    %vm268 = vcmask 257024
    %v269 = vsel %vm268, %v267, 0.0
    %270 = vadd.xlane.f32.xlu0 %v269
    %v271 = vpop.xlane.xlu0 %270
    %v272 = vlaneseq
    %v273 = vshrl.u32 %v272, 7
    %v274 = vsub.s32 1, %v273
    %v275 = vrot.slane %v262, %v274
    %v276 = vmul.f32 %v261, %v275
    %v277 = vsel %vm268, %v276, 0.0
    %278 = vadd.xlane.f32.xlu0 %v277
    %v279 = vpop.xlane.xlu0 %278
    %vm280 = vcmask 7168
    %v281 = vsel %vm280, %v271, %v279
    %v282 = vld [vmem:[#allocation6] sm:$0x1]
    %v284 = vlaneseq
    %v285 = vshrl.u32 %v284, 7
    %v286 = vsub.s32 0, %v285
    %v287 = vrot.slane %v282, %v286
    %v289 = vadd.f32 %v281, %v287
    %vm290 = vcmask 11264
    %291 = vst.msk [vmem:[%s7] sm:$0xf] %vm290, %v289
    // Predicated region
    $region42: #{critic_forward.1} parent=1 // pred_check
      _
    $region43: #{critic_forward.1} parent=1 // pred_check_branch
      %293 = sbr.rel (0) target = $region45
    $region44: #{critic_forward.1} parent=1 // pred_region
      _
    $region45: #{critic_forward.1} parent=1 // pred_fallthru
      _
    // Predicated region
    $region46: #{critic_forward.1} parent=1 // pred_check
      _
    $region47: #{critic_forward.1} parent=1 // pred_check_branch
      %295 = sbr.rel (0) target = $region49
    $region48: #{critic_forward.1} parent=1 // pred_region
      _
    $region49: #{critic_forward.1} parent=1 // pred_fallthru
      _
    %296 = vsyncpa [#allocation3], 1
    %297 = vsyncpa [#allocation5], 1

</llo_original>
